<compile_context>
chip_gen: v5e
topology: v5e:2x2
jax: 0.10.0
libtpu: 0.0.40
codegen_flags: <defaults>
</compile_context>

<pallas_src>
import functools

import jax
import jax.numpy as jnp
from jax.experimental import pallas as pl
from jax.experimental.pallas import tpu as pltpu


def _policy_mean_kernel(state_ref, params_ref, mean_ref, *, state_dim,
                        action_dim):
    """One batch tile of the mean MLP, batch-in-lanes.

    state_ref : (S, TILE_B)       VMEM  -- state^T tile (batch in lanes)
    params_ref: (H, S + A + 2)    VMEM, packed (pinned across grid steps):
                  cols [0, S)       -> w1^T          (H, S)
                  col  S            -> b1            (H, 1)
                  cols [S+1, S+1+A) -> w2            (H, A)
                  col  S+1+A        -> b2 in rows [0, A)
    mean_ref  : (A, TILE_B)       VMEM  -- mean^T tile (lane-dense output)
    """
    S, A = state_dim, action_dim

    w1t = params_ref[:, 0:S]                    # (H, S)
    b1c = params_ref[:, S:S + 1]                # (H, 1)

    # Hidden layer on the MXU: (H, S) @ (S, TILE_B) + (H, 1), ReLU.
    h = jnp.dot(w1t, state_ref[...], preferred_element_type=jnp.float32) + b1c
    h = jnp.maximum(h, 0.0)                     # (H, TILE_B) f32

    b2c = params_ref[0:A, S + 1 + A:S + 2 + A]  # (A, 1)

    if A == 1:
        # Output layer as VPU broadcast-multiply + sublane reduce: lane-dense
        # (1, TILE_B) result, no MXU push for a single output row.
        w2c = params_ref[:, S + 1:S + 2]                        # (H, 1)
        mean_t = jnp.sum(h * w2c, axis=0, keepdims=True)        # (1, TILE_B)
    else:
        # Single contraction over H: (H, A) x (H, TILE_B) -> (A, TILE_B).
        w2 = params_ref[:, S + 1:S + 1 + A]                     # (H, A)
        mean_t = jax.lax.dot_general(
            w2, h, (((0,), (0,)), ((), ())),
            preferred_element_type=jnp.float32)                 # (A, TILE_B)

    mean_ref[...] = (mean_t + b2c).astype(mean_ref.dtype)


def _round_up(x, m):
    return ((x + m - 1) // m) * m


def pack_policy_params(w1, b1, w2, b2):
    """Packs all MLP parameters into one (H, S + A + 2) fp32 array.

    Hoist this out of the per-step path when weights are reused across many
    forward calls.
    """
    S, H = w1.shape
    H2, A = w2.shape
    assert H2 == H and b1.shape == (H,) and b2.shape == (A,)
    assert A <= H, "packing requires action_dim <= hidden_dim"
    packed = jnp.zeros((H, S + A + 2), jnp.float32)
    packed = packed.at[:, 0:S].set(w1.T.astype(jnp.float32))        # w1^T
    packed = packed.at[:, S].set(b1.astype(jnp.float32))            # b1 column
    packed = packed.at[:, S + 1:S + 1 + A].set(w2.astype(jnp.float32))  # w2
    packed = packed.at[0:A, S + 1 + A].set(b2.astype(jnp.float32))  # b2 column
    return packed


def stochastic_optimal_control_policy(state, w1, b1, w2, b2, log_std, *,
                                      tile_b=4096, packed_params=None):
    """Returns (mean, std) of the action distribution.

    state:   (B, state_dim) or (state_dim,) float32
    w1:      (state_dim, hidden)       [PyTorch weight^T]
    b1:      (hidden,)
    w2:      (hidden, action_dim)      [PyTorch weight^T]
    b2:      (action_dim,)
    log_std: (action_dim,)
    """
    squeeze_batch = state.ndim == 1
    if squeeze_batch:
        state = state[None, :]
    state = state.astype(jnp.float32)

    B, S = state.shape
    S_w, H = w1.shape
    H_w, A = w2.shape
    assert S == S_w and H == H_w and b1.shape == (H,)
    assert b2.shape == (A,) and log_std.shape == (A,)
    assert A <= H

    packed = pack_policy_params(w1, b1, w2, b2) if packed_params is None \
        else packed_params

    # Batch-in-lanes: the kernel reads state^T (S, B). The wrapper transpose
    # is cheap (S is tiny) and buys lane-dense input/output DMAs.
    state_t = state.T                                    # (S, B)

    # Batch tile: multiple of 128 lanes, clamped for small batches. No jnp.pad:
    # the last grid step reads past B (masked on the output writeback).
    tile = min(int(tile_b), _round_up(B, 128))
    tile = max(128, _round_up(tile, 128))
    grid = (pl.cdiv(B, tile),)

    mean_t = pl.pallas_call(
        functools.partial(_policy_mean_kernel, state_dim=S, action_dim=A),
        out_shape=jax.ShapeDtypeStruct((A, B), jnp.float32),
        grid=grid,
        in_specs=[
            pl.BlockSpec((S, tile), lambda i: (0, i)),           # state^T tile
            pl.BlockSpec((H, S + A + 2), lambda i: (0, 0)),      # packed params (pinned)
        ],
        out_specs=pl.BlockSpec((A, tile), lambda i: (0, i)),     # mean^T tile
        # "parallel" is portable across v5e/v6e/v7x. On v7x, if profiling shows
        # one TensorCore idle, switch to pltpu.CORE_PARALLEL on this axis.
        compiler_params=pltpu.CompilerParams(
            dimension_semantics=("parallel",)),
    )(state_t, packed)

    mean = mean_t.T                                      # (B, A)
    if squeeze_batch:
        mean = mean[0]

    # std = exp(log_std): action_dim scalars -> computed outside the kernel.
    std = jnp.exp(log_std.astype(jnp.float32))

    # TODO(synk): torch.distributions.Normal / rsample (random distribution
    # object) has no Pallas equivalent; we return its sufficient statistics.
    return mean, std


def _reference(state, w1, b1, w2, b2, log_std):
    h = jnp.maximum(state @ w1 + b1[None, :], 0.0)
    mean = h @ w2 + b2[None, :]
    std = jnp.exp(log_std)
    return mean, std


if __name__ == "__main__":
    # CartPole-like dims: state_dim=4, continuous action_dim=1.
    state_dim, hidden_dim, action_dim = 4, 64, 1
    batch = 8

    key = jax.random.PRNGKey(0)
    k_state, k_w1, k_b1, k_w2, k_b2 = jax.random.split(key, 5)

    state = jax.random.normal(k_state, (batch, state_dim), dtype=jnp.float32)

    # Deterministic synthetic parameter init (uniform, PyTorch-Linear-like scale).
    bound1 = 1.0 / (state_dim ** 0.5)
    bound2 = 1.0 / (hidden_dim ** 0.5)
    w1 = jax.random.uniform(k_w1, (state_dim, hidden_dim), jnp.float32,
                            -bound1, bound1)
    b1 = jax.random.uniform(k_b1, (hidden_dim,), jnp.float32, -bound1, bound1)
    w2 = jax.random.uniform(k_w2, (hidden_dim, action_dim), jnp.float32,
                            -bound2, bound2)
    b2 = jax.random.uniform(k_b2, (action_dim,), jnp.float32, -bound2, bound2)
    # nn.Parameter(torch.zeros(action_dim))
    log_std = jnp.zeros((action_dim,), dtype=jnp.float32)

    mean, std = stochastic_optimal_control_policy(state, w1, b1, w2, b2,
                                                  log_std)
    jax.block_until_ready((mean, std))

    ref_mean, ref_std = _reference(state, w1, b1, w2, b2, log_std)
    assert mean.shape == (batch, action_dim)
    assert std.shape == (action_dim,)
    assert jnp.allclose(mean, ref_mean, atol=1e-4, rtol=1e-4)
    assert jnp.allclose(std, ref_std, atol=1e-6, rtol=1e-6)

    print("KERNEL_OK")
</pallas_src>

<mosaic_0001>
module attributes {stable_mosaic.version = 11 : i64} {
  func.func @_policy_mean_kernel(%arg0: i32, %arg1: memref<4x128xf32, #tpu.memory_space<vmem>>, %arg2: memref<64x7xf32, #tpu.memory_space<vmem>>, %arg3: memref<1x128xf32, #tpu.memory_space<vmem>>) attributes {dimension_semantics = [#tpu.dimension_semantics<parallel>], iteration_bounds = array<i64: 1>, scalar_prefetch = 0 : i64, scratch_operands = 0 : i64, tpu.core_type = #tpu.core_type<tc>, window_params = [{transform_indices = @transform_0, window_bounds = array<i64: 4, 128>}, {pipeline_mode = #tpu.pipeline_mode<synchronous>, transform_indices = @transform_1, window_bounds = array<i64: 64, 7>}, {transform_indices = @transform_2, window_bounds = array<i64: 1, 128>}]} {
    %c0 = arith.constant 0 : index
    %c0_0 = arith.constant 0 : index
    %0 = vector.load %arg2[%c0, %c0_0] : memref<64x7xf32, #tpu.memory_space<vmem>>, vector<64x4xf32>
    %c0_1 = arith.constant 0 : index
    %c4 = arith.constant 4 : index
    %1 = vector.load %arg2[%c0_1, %c4] : memref<64x7xf32, #tpu.memory_space<vmem>>, vector<64x1xf32>
    %c0_2 = arith.constant 0 : index
    %c0_3 = arith.constant 0 : index
    %2 = vector.load %arg1[%c0_2, %c0_3] : memref<4x128xf32, #tpu.memory_space<vmem>>, vector<4x128xf32>
    %cst = arith.constant dense<0.000000e+00> : vector<64x128xf32>
    %3 = tpu.matmul %0, %2, %cst {dimension_numbers = #tpu.dot_dimension_numbers<[1], [0], [0], [1], [0, 0, 1, 1], [], []>} : vector<64x4xf32>, vector<4x128xf32>, vector<64x128xf32> -> vector<64x128xf32>
    %4 = vector.broadcast %1 : vector<64x1xf32> to vector<64x128xf32>
    %5 = arith.addf %3, %4 : vector<64x128xf32>
    %cst_4 = arith.constant 0.000000e+00 : f32
    %6 = vector.broadcast %cst_4 : f32 to vector<64x128xf32>
    %7 = arith.maximumf %5, %6 : vector<64x128xf32>
    %c0_5 = arith.constant 0 : index
    %c6 = arith.constant 6 : index
    %8 = vector.load %arg2[%c0_5, %c6] : memref<64x7xf32, #tpu.memory_space<vmem>>, vector<1x1xf32>
    %c0_6 = arith.constant 0 : index
    %c5 = arith.constant 5 : index
    %9 = vector.load %arg2[%c0_6, %c5] : memref<64x7xf32, #tpu.memory_space<vmem>>, vector<64x1xf32>
    %10 = vector.broadcast %9 : vector<64x1xf32> to vector<64x128xf32>
    %11 = arith.mulf %7, %10 : vector<64x128xf32>
    %cst_7 = arith.constant dense<0.000000e+00> : vector<128xf32>
    %12 = vector.multi_reduction <add>, %11, %cst_7 [0] : vector<64x128xf32> to vector<128xf32>
    %13 = vector.shape_cast %12 : vector<128xf32> to vector<1x128xf32>
    %14 = vector.broadcast %8 : vector<1x1xf32> to vector<1x128xf32>
    %15 = arith.addf %13, %14 : vector<1x128xf32>
    %c0_8 = arith.constant 0 : index
    %c0_9 = arith.constant 0 : index
    %16 = vector.load %arg3[%c0_8, %c0_9] : memref<1x128xf32, #tpu.memory_space<vmem>>, vector<1x128xf32>
    tpu.vector_store %arg3[%c0_8, %c0_9], %15 {strides = array<i32>} : memref<1x128xf32, #tpu.memory_space<vmem>>, vector<1x128xf32>,
    return
  }
  func.func @transform_0(%arg0: i32) -> (i32, i32) {
    %c0_i32 = arith.constant 0 : i32
    %c0_i32_0 = arith.constant 0 : i32
    return %c0_i32, %arg0 : i32, i32
  }
  func.func @transform_1(%arg0: i32) -> (i32, i32) {
    %c0_i32 = arith.constant 0 : i32
    %c0_i32_0 = arith.constant 0 : i32
    %c0_i32_1 = arith.constant 0 : i32
    return %c0_i32, %c0_i32_0 : i32, i32
  }
  func.func @transform_2(%arg0: i32) -> (i32, i32) {
    %c0_i32 = arith.constant 0 : i32
    %c0_i32_0 = arith.constant 0 : i32
    return %c0_i32, %arg0 : i32, i32
  }
}

</mosaic_0001>

<llo_original>
// kernel: tpu_custom_call.1
$region0: #{tpu_custom_call.1}
  #allocation0 [shape = 'u32[]', space=smem, size = 0x4, offset = 0x4, fixed_abs, tag = 'smem constant byte address 0x4 - core index']
  #allocation1 [shape = 'u32[72,128]{1,0:T(1,128)}', space=vmem, size = 0x9000, scoped, tag = 'internal scratch']
  %s0 = inlined_call_operand.vmem [shape: f32[4,8], index: 0, kind: input, shape index: {}]
  %s1 = inlined_call_operand.vmem [shape: f32[64,7], index: 1, kind: input, shape index: {}]
  %s2 = inlined_call_operand.hbm [shape: f32[1,8], index: 2, kind: output, shape index: {}]
  %s3 = sld [smem:[#allocation0]]
  $region18: #{tpu_custom_call.1} parent=0
    _
  %s5 = ssub.s32 1, %s3
  %s6 = scalar_select 0, %s5, %s3
  $region1: #{tpu_custom_call.1} parent=0
    #allocation2 [shape = 'u8[512]{0}', space=vmem, size = 0x400, scoped, tag = 'output window, operand 0, single buffered']
    #allocation3 [shape = 's32[1]{0}', space=sflag, size = 0x4, scoped, tag = 'scoped memory for tpu_custom_call.1']
    %7 = vsyncpa [#allocation3], 0
    // Predicated region
    $region2: #{tpu_custom_call.1} parent=1 // pred_check
      _
    $region3: #{tpu_custom_call.1} parent=1 // pred_check_branch
      %9 = sbr.rel (0) target = $region5
    $region4: #{tpu_custom_call.1} parent=1 // pred_region
      _
    $region5: #{tpu_custom_call.1} parent=1 // pred_fallthru
      _
    // Predicated region
    $region6: #{tpu_custom_call.1} parent=1 // pred_check
      _
    $region7: #{tpu_custom_call.1} parent=1 // pred_check_branch
      %11 = sbr.rel (0) target = $region9
    $region8: #{tpu_custom_call.1} parent=1 // pred_region
      _
    $region9: #{tpu_custom_call.1} parent=1 // pred_fallthru
      _
    %v12 = vld [vmem:[%s1] sm:$0xff]
    %v13 = vld [vmem:[%s1 + $0x8] sm:$0xff]
    %v14 = vld [vmem:[%s1 + $0x10] sm:$0xff]
    %v15 = vld [vmem:[%s1 + $0x18] sm:$0xff]
    %v16 = vld [vmem:[%s1 + $0x20] sm:$0xff]
    %v17 = vld [vmem:[%s1 + $0x28] sm:$0xff]
    %v18 = vld [vmem:[%s1 + $0x30] sm:$0xff]
    %v19 = vld [vmem:[%s1 + $0x38] sm:$0xff]
    %v20 = vld [vmem:[%s0] sm:$0xf]
    %22 = vset.pattern.permute.xlu0 4
    %23 = vperm.xlu0 %22, %v12
    %v24 = vpop.permute.xlu0 %23
    %27 = vset.pattern.permute.xlu0 4
    %28 = vperm.xlu0 %27, %v13
    %v29 = vpop.permute.xlu0 %28
    %32 = vset.pattern.permute.xlu0 4
    %33 = vperm.xlu0 %32, %v14
    %v34 = vpop.permute.xlu0 %33
    %37 = vset.pattern.permute.xlu0 4
    %38 = vperm.xlu0 %37, %v15
    %v39 = vpop.permute.xlu0 %38
    %42 = vset.pattern.permute.xlu0 4
    %43 = vperm.xlu0 %42, %v16
    %v44 = vpop.permute.xlu0 %43
    %47 = vset.pattern.permute.xlu0 4
    %48 = vperm.xlu0 %47, %v17
    %v49 = vpop.permute.xlu0 %48
    %52 = vset.pattern.permute.xlu0 4
    %53 = vperm.xlu0 %52, %v18
    %v54 = vpop.permute.xlu0 %53
    %57 = vset.pattern.permute.xlu0 4
    %58 = vperm.xlu0 %57, %v19
    %v59 = vpop.permute.xlu0 %58
    %vm61 = vcmask 31744
    %v62 = vsel %vm61, %v12, 0
    %v64 = vsel %vm61, %v13, 0
    %v66 = vsel %vm61, %v14, 0
    %v68 = vsel %vm61, %v15, 0
    %v70 = vsel %vm61, %v16, 0
    %v72 = vsel %vm61, %v17, 0
    %v74 = vsel %vm61, %v18, 0
    %v76 = vsel %vm61, %v19, 0
    %vm78 = vcmask 1043456
    %v80 = vsel %vm78, %v20, 0
    %82 = vmatpush.msra.mxu0 0.0
    %83 = vmatpush.msra.mxu0 0.0
    %84 = vmatpush.msra.mxu0 0.0
    %85 = vmatpush.msra.mxu0 0.0
    %86 = vmatpush.msra.mxu0 0.0
    %87 = vmatpush.msra.mxu0 0.0
    %88 = vmatpush.msra.mxu0 0.0
    %89 = vmatpush.msra.mxu0 0.0
    %90 = vmatpush.msra.mxu0 0.0
    %91 = vmatpush.msra.mxu0 0.0
    %92 = vmatpush.msra.mxu0 0.0
    %93 = vmatpush.msra.mxu0 0.0
    %94 = vmatpush.msra.mxu0 0.0
    %95 = vmatpush.msra.mxu0 0.0
    %96 = vmatpush.msra.mxu0 0.0
    %97 = vmatpush.msra.mxu0 %v80
    %98 = vmatmul.f32.gmra.mxu0 %v62
    %v99 = vpop.f32.mrf.mxu0
    %v100 = vadd.f32 %v24, %v99
    %101 = vmatmul.f32.gmra.mxu0 %v64
    %v102 = vpop.f32.mrf.mxu0
    %v103 = vadd.f32 %v29, %v102
    %104 = vmatmul.f32.gmra.mxu0 %v66
    %v105 = vpop.f32.mrf.mxu0
    %v106 = vadd.f32 %v34, %v105
    %107 = vmatmul.f32.gmra.mxu0 %v68
    %v108 = vpop.f32.mrf.mxu0
    %v109 = vadd.f32 %v39, %v108
    %110 = vmatmul.f32.gmra.mxu0 %v70
    %v111 = vpop.f32.mrf.mxu0
    %v112 = vadd.f32 %v44, %v111
    %113 = vmatmul.f32.gmra.mxu0 %v72
    %v114 = vpop.f32.mrf.mxu0
    %v115 = vadd.f32 %v49, %v114
    %116 = vmatmul.f32.gmra.mxu0 %v74
    %v117 = vpop.f32.mrf.mxu0
    %v118 = vadd.f32 %v54, %v117
    %119 = vmatmul.f32.gmra.mxu0 %v76
    %v120 = vpop.f32.mrf.mxu0
    %v121 = vadd.f32 %v59, %v120
    %122 = vdwg.mxu0
    %v123 = vmax.f32 %v100, 0.0
    %v124 = vmax.f32 %v103, 0.0
    %v125 = vmax.f32 %v106, 0.0
    %v126 = vmax.f32 %v109, 0.0
    %v127 = vmax.f32 %v112, 0.0
    %v128 = vmax.f32 %v115, 0.0
    %v129 = vmax.f32 %v118, 0.0
    %v130 = vmax.f32 %v121, 0.0
    %v131 = vld [vmem:[%s1] sm:$0x1]
    %132 = vset.pattern.permute.xlu0 5
    %133 = vperm.xlu0 %132, %v12
    %v134 = vpop.permute.xlu0 %133
    %136 = vset.pattern.permute.xlu0 5
    %137 = vperm.xlu0 %136, %v13
    %v138 = vpop.permute.xlu0 %137
    %140 = vset.pattern.permute.xlu0 5
    %141 = vperm.xlu0 %140, %v14
    %v142 = vpop.permute.xlu0 %141
    %144 = vset.pattern.permute.xlu0 5
    %145 = vperm.xlu0 %144, %v15
    %v146 = vpop.permute.xlu0 %145
    %148 = vset.pattern.permute.xlu0 5
    %149 = vperm.xlu0 %148, %v16
    %v150 = vpop.permute.xlu0 %149
    %152 = vset.pattern.permute.xlu0 5
    %153 = vperm.xlu0 %152, %v17
    %v154 = vpop.permute.xlu0 %153
    %156 = vset.pattern.permute.xlu0 5
    %157 = vperm.xlu0 %156, %v18
    %v158 = vpop.permute.xlu0 %157
    %160 = vset.pattern.permute.xlu0 5
    %161 = vperm.xlu0 %160, %v19
    %v162 = vpop.permute.xlu0 %161
    %v164 = vmul.f32 %v123, %v134
    %v165 = vmul.f32 %v124, %v138
    %v166 = vmul.f32 %v125, %v142
    %v167 = vmul.f32 %v126, %v146
    %v168 = vmul.f32 %v127, %v150
    %v169 = vmul.f32 %v128, %v154
    %v170 = vmul.f32 %v129, %v158
    %v171 = vmul.f32 %v130, %v162
    %v172 = vadd.f32 %v164, %v165
    %v173 = vadd.f32 %v172, %v166
    %v174 = vadd.f32 %v173, %v167
    %v175 = vadd.f32 %v174, %v168
    %v176 = vadd.f32 %v175, %v169
    %v177 = vadd.f32 %v176, %v170
    %v178 = vadd.f32 %v177, %v171
    %v179 = vrot.slane %v178, 4
    %v180 = vadd.f32 %v178, %v179
    %v181 = vrot.slane %v180, 2
    %v182 = vadd.f32 %v180, %v181
    %v183 = vrot.slane %v182, 1
    %v184 = vadd.f32 %v182, %v183
    %186 = vset.pattern.permute.xlu0 6
    %187 = vperm.xlu0 %186, %v131
    %v188 = vpop.permute.xlu0 %187
    %v190 = vadd.f32 %v184, %v188
    %191 = vst [vmem:[#allocation2] sm:$0x1] %v190
    // Predicated region
    $region10: #{tpu_custom_call.1} parent=1 // pred_check
      _
    $region11: #{tpu_custom_call.1} parent=1 // pred_check_branch
      %193 = sbr.rel (0) target = $region13
    $region12: #{tpu_custom_call.1} parent=1 // pred_region
      %195 = vsyncadd [#allocation3], 0
      %s197 = sshll.u32 [#allocation2], 4
      %s198 = int_to_ptr.vmem [resolvable:$true] %s197
      %s199 = sshll.u32 %s2, 4
      %s200 = int_to_ptr.hbm [resolvable:$true] %s199
      %202 = dma.vmem_to_hbm [thread:$0]  %s198, 16, %s200, [#allocation3]
    $region13: #{tpu_custom_call.1} parent=1 // pred_fallthru
      _
    // Predicated region
    $region14: #{tpu_custom_call.1} parent=1 // pred_check
      _
    $region15: #{tpu_custom_call.1} parent=1 // pred_check_branch
      %204 = sbr.rel (0) target = $region17
    $region16: #{tpu_custom_call.1} parent=1 // pred_region
      %206 = dma.done [#allocation3], 16
    $region17: #{tpu_custom_call.1} parent=1 // pred_fallthru
      _
    %207 = vsyncpa [#allocation3], 1

</llo_original>
